<compile_context>
chip_gen: v7x
topology: tpu7x:2x2x1
jax: 0.10.0
libtpu: 0.0.40
codegen_flags: <defaults>
</compile_context>

<pallas_src>
import jax
import jax.numpy as jnp
from jax.experimental import pallas as pl
from jax.experimental.pallas import tpu as pltpu


def _leaky_relu(x, negative_slope=0.01):
    # torch.nn.LeakyReLU default negative_slope = 0.01
    return jnp.where(x > 0, x, negative_slope * x)


def _round_up(v, m):
    return (v + m - 1) // m * m


def _entropy_param_kernel(x_ref, w1_ref, b1_ref, w2_ref, b2_ref, w3_ref, b3_ref,
                          o_ref):
    # x_ref: (1, C_in, T) pixel tile with pixels on the lane axis.
    # Weights are (out, in) as stored by nn.Conv2d -> each layer is W @ X.
    # Matmuls run in w*_ref.dtype (bf16 by default) with f32 accumulation;
    # bias add + LeakyReLU stay in f32 (VPU/EUP f32 path, exact epilogue).
    mxu_dtype = w1_ref.dtype
    x = x_ref[0].astype(mxu_dtype)                                # (C_in, T)

    h = jnp.dot(w1_ref[...], x, preferred_element_type=jnp.float32)
    h = _leaky_relu(h + b1_ref[...])                              # (H1p, T) f32

    h = jnp.dot(w2_ref[...], h.astype(mxu_dtype),
                preferred_element_type=jnp.float32)
    h = _leaky_relu(h + b2_ref[...])                              # (H2p, T) f32

    y = jnp.dot(w3_ref[...], h.astype(mxu_dtype),
                preferred_element_type=jnp.float32)
    y = y + b3_ref[...]                                           # (C_out, T)
    o_ref[0] = y.astype(o_ref.dtype)


def conv1x1_entropy_parameter(x_nchw, params, *, tile_pixels=1024,
                              matmul_dtype=jnp.bfloat16,
                              vmem_budget_bytes=24 * 1024 * 1024):
    """Apply the 3-layer 1x1-conv entropy parameter network.

    x_nchw: (N, Cin, H, W)
    params: dict with w1 (H1, Cin), b1 (H1,), w2 (H2, H1), b2 (H2,),
            w3 (Cout, H2), b3 (Cout,)  -- PyTorch Conv2d layout (out, in).
    matmul_dtype: dtype fed to the MXU (bf16 default; pass jnp.float32 for a
            bit-faithful f32 path).  Accumulation/epilogue are always f32.
    """
    n, c_in, hh, ww = x_nchw.shape
    hw = hh * ww

    w1, b1 = params["w1"], params["b1"]
    w2, b2 = params["w2"], params["b2"]
    w3, b3 = params["w3"], params["b3"]
    h1, h2, c_out = w1.shape[0], w2.shape[0], w3.shape[0]
    assert w1.shape[1] == c_in, "weight/input channel mismatch"

    # Zero-pad hidden channel dims to sublane multiples (exact: padded rows are
    # zero -> padded activations are lrelu(0)=0 -> contribute nothing downstream).
    h1p = _round_up(h1, 8)
    h2p = _round_up(h2, 8)
    w1p = jnp.zeros((h1p, c_in), matmul_dtype).at[:h1, :].set(w1.astype(matmul_dtype))
    w2p = jnp.zeros((h2p, h1p), matmul_dtype).at[:h2, :h1].set(w2.astype(matmul_dtype))
    w3p = jnp.zeros((c_out, h2p), matmul_dtype).at[:, :h2].set(w3.astype(matmul_dtype))
    b1p = jnp.zeros((h1p, 1), jnp.float32).at[:h1, 0].set(b1.astype(jnp.float32))
    b2p = jnp.zeros((h2p, 1), jnp.float32).at[:h2, 0].set(b2.astype(jnp.float32))
    b3p = b3.astype(jnp.float32).reshape(c_out, 1)

    # NCHW already stores (N, C, H*W): plain reshape, no HBM transpose pass.
    x3 = x_nchw.reshape(n, c_in, hw)

    # Pick a lane-dense pixel tile (multiple of 128) as large as the VMEM budget
    # allows; pad the spatial axis up rather than shrinking the tile.
    act_bytes = jnp.dtype(x_nchw.dtype).itemsize
    w_bytes = jnp.dtype(matmul_dtype).itemsize
    weight_vmem = 2 * w_bytes * (h1p * c_in + h2p * h1p + c_out * h2p)

    def vmem_est(t):
        return (2 * (c_in + c_out) * t * act_bytes      # double-buffered in/out tiles
                + (c_in + h1p + h2p + c_out) * t * 4    # live f32/bf16 intermediates
                + weight_vmem)                          # resident weights (2 bufs)

    tile = max(128, min(int(tile_pixels), _round_up(hw, 128)))
    tile = _round_up(tile, 128)
    while tile > 128 and vmem_est(tile) > vmem_budget_bytes:
        tile = _round_up(tile // 2, 128)

    if hw <= tile:
        tile, hw_pad = hw, hw            # full-dim block: no padding needed
    else:
        hw_pad = _round_up(hw, tile)     # tile is a multiple of 128

    if hw_pad != hw:
        x3 = jnp.pad(x3, ((0, 0), (0, 0), (0, hw_pad - hw)))

    grid = (n, hw_pad // tile)
    const = lambda b, p: (0, 0)
    # NOTE: weight/bias index_maps are grid-invariant, so Pallas DMAs them into
    # VMEM only once (their double-buffer reservation is tiny vs. the budget).

    out3 = pl.pallas_call(
        _entropy_param_kernel,
        out_shape=jax.ShapeDtypeStruct((n, c_out, hw_pad), x_nchw.dtype),
        grid_spec=pltpu.PrefetchScalarGridSpec(
            num_scalar_prefetch=0,
            grid=grid,
            in_specs=[
                pl.BlockSpec((1, c_in, tile), lambda b, p: (b, 0, p)),
                pl.BlockSpec((h1p, c_in), const),
                pl.BlockSpec((h1p, 1), const),
                pl.BlockSpec((h2p, h1p), const),
                pl.BlockSpec((h2p, 1), const),
                pl.BlockSpec((c_out, h2p), const),
                pl.BlockSpec((c_out, 1), const),
            ],
            out_specs=pl.BlockSpec((1, c_out, tile), lambda b, p: (b, 0, p)),
        ),
        compiler_params=pltpu.CompilerParams(
            dimension_semantics=("parallel", "parallel"),
            vmem_limit_bytes=48 * 1024 * 1024),
    )(x3, w1p, b1p, w2p, b2p, w3p, b3p)

    if hw_pad != hw:
        out3 = out3[:, :, :hw]
    return out3.reshape(n, c_out, hh, ww)


def init_params(key, latent_channels):
    """Deterministic synthetic init matching the PyTorch module's shapes."""
    c_in = latent_channels * 12 // 3   # 4 * lc
    h1 = latent_channels * 10 // 3
    h2 = latent_channels * 8 // 3
    c_out = latent_channels * 6 // 3   # 2 * lc

    keys = jax.random.split(key, 6)

    def conv_init(kw, kb, fan_out, fan_in):
        # Kaiming-uniform-ish deterministic init; shapes match nn.Conv2d(in, out, 1)
        # weight (out, in, 1, 1) squeezed to (out, in), bias (out,)
        bound = 1.0 / jnp.sqrt(fan_in)
        w = jax.random.uniform(kw, (fan_out, fan_in), jnp.float32, -bound, bound)
        b = jax.random.uniform(kb, (fan_out,), jnp.float32, -bound, bound)
        return w, b

    w1, b1 = conv_init(keys[0], keys[1], h1, c_in)
    w2, b2 = conv_init(keys[2], keys[3], h2, h1)
    w3, b3 = conv_init(keys[4], keys[5], c_out, h2)
    return {"w1": w1, "b1": b1, "w2": w2, "b2": b2, "w3": w3, "b3": b3}


def _reference(x_nchw, params):
    """Pure-JAX f32 reference (1x1 conv == channel matmul per pixel)."""
    x = jnp.transpose(x_nchw, (0, 2, 3, 1))  # NHWC
    h = x @ params["w1"].T + params["b1"]
    h = _leaky_relu(h)
    h = h @ params["w2"].T + params["b2"]
    h = _leaky_relu(h)
    y = h @ params["w3"].T + params["b3"]
    return jnp.transpose(y, (0, 3, 1, 2))


if __name__ == "__main__":
    latent_channels = 6  # -> Cin=24, H1=20, H2=16, Cout=12
    n, hh, ww = 2, 16, 16
    c_in = latent_channels * 12 // 3

    key = jax.random.PRNGKey(0)
    k_x, k_p = jax.random.split(key)
    x = jax.random.normal(k_x, (n, c_in, hh, ww), jnp.float32)
    params = init_params(k_p, latent_channels)

    ref = _reference(x, params)

    # f32-MXU path: bit-faithful check against the pure-JAX reference.
    out_f32 = jax.block_until_ready(
        conv1x1_entropy_parameter(x, params, matmul_dtype=jnp.float32))
    assert out_f32.shape == (n, latent_channels * 2, hh, ww), out_f32.shape
    assert jnp.allclose(out_f32, ref, atol=1e-4, rtol=1e-4), "f32 mismatch vs reference"

    # Default bf16-on-MXU path (f32 accumulate + f32 epilogue): looser tolerance.
    out_bf16 = jax.block_until_ready(conv1x1_entropy_parameter(x, params))
    assert out_bf16.shape == (n, latent_channels * 2, hh, ww), out_bf16.shape
    assert jnp.allclose(out_bf16, ref, atol=2e-2, rtol=2e-2), "bf16 mismatch vs reference"

    print("KERNEL_OK")
</pallas_src>

<mosaic_0001>
module attributes {stable_mosaic.version = 11 : i64} {
  func.func @_entropy_param_kernel(%arg0: i32, %arg1: i32, %arg2: memref<1x24x256xf32, #tpu.memory_space<vmem>>, %arg3: memref<24x24xf32, #tpu.memory_space<vmem>>, %arg4: memref<24x1xf32, #tpu.memory_space<vmem>>, %arg5: memref<16x24xf32, #tpu.memory_space<vmem>>, %arg6: memref<16x1xf32, #tpu.memory_space<vmem>>, %arg7: memref<12x16xf32, #tpu.memory_space<vmem>>, %arg8: memref<12x1xf32, #tpu.memory_space<vmem>>, %arg9: memref<1x12x256xf32, #tpu.memory_space<vmem>>) attributes {dimension_semantics = [#tpu.dimension_semantics<parallel>, #tpu.dimension_semantics<parallel>], iteration_bounds = array<i64: 2, 1>, scalar_prefetch = 0 : i64, scratch_operands = 0 : i64, tpu.core_type = #tpu.core_type<tc>, window_params = [{transform_indices = @transform_0, window_bounds = array<i64: 1, 24, 256>}, {pipeline_mode = #tpu.pipeline_mode<synchronous>, transform_indices = @transform_1, window_bounds = array<i64: 24, 24>}, {pipeline_mode = #tpu.pipeline_mode<synchronous>, transform_indices = @transform_2, window_bounds = array<i64: 24, 1>}, {pipeline_mode = #tpu.pipeline_mode<synchronous>, transform_indices = @transform_3, window_bounds = array<i64: 16, 24>}, {pipeline_mode = #tpu.pipeline_mode<synchronous>, transform_indices = @transform_4, window_bounds = array<i64: 16, 1>}, {pipeline_mode = #tpu.pipeline_mode<synchronous>, transform_indices = @transform_5, window_bounds = array<i64: 12, 16>}, {pipeline_mode = #tpu.pipeline_mode<synchronous>, transform_indices = @transform_6, window_bounds = array<i64: 12, 1>}, {transform_indices = @transform_7, window_bounds = array<i64: 1, 12, 256>}]} {
    %c0 = arith.constant 0 : index
    %c0_0 = arith.constant 0 : index
    %c0_1 = arith.constant 0 : index
    %0 = vector.load %arg2[%c0, %c0_0, %c0_1] : memref<1x24x256xf32, #tpu.memory_space<vmem>>, vector<1x24x256xf32>
    %1 = vector.shape_cast %0 : vector<1x24x256xf32> to vector<24x256xf32>
    %c0_2 = arith.constant 0 : index
    %c0_3 = arith.constant 0 : index
    %2 = vector.load %arg3[%c0_2, %c0_3] : memref<24x24xf32, #tpu.memory_space<vmem>>, vector<24x24xf32>
    %cst = arith.constant dense<0.000000e+00> : vector<24x256xf32>
    %3 = tpu.matmul %2, %1, %cst {dimension_numbers = #tpu.dot_dimension_numbers<[1], [0], [0], [1], [0, 0, 1, 1], [], []>} : vector<24x24xf32>, vector<24x256xf32>, vector<24x256xf32> -> vector<24x256xf32>
    %c0_4 = arith.constant 0 : index
    %c0_5 = arith.constant 0 : index
    %4 = vector.load %arg4[%c0_4, %c0_5] : memref<24x1xf32, #tpu.memory_space<vmem>>, vector<24x1xf32>
    %5 = vector.broadcast %4 : vector<24x1xf32> to vector<24x256xf32>
    %6 = arith.addf %3, %5 : vector<24x256xf32>
    %cst_6 = arith.constant 0.000000e+00 : f32
    %7 = vector.broadcast %cst_6 : f32 to vector<24x256xf32>
    %8 = arith.cmpf ogt, %6, %7 : vector<24x256xf32>
    %cst_7 = arith.constant 0.00999999977 : f32
    %9 = vector.broadcast %cst_7 : f32 to vector<24x256xf32>
    %10 = arith.mulf %9, %6 : vector<24x256xf32>
    %11 = arith.select %8, %6, %10 : vector<24x256xi1>, vector<24x256xf32>
    %c0_8 = arith.constant 0 : index
    %c0_9 = arith.constant 0 : index
    %12 = vector.load %arg5[%c0_8, %c0_9] : memref<16x24xf32, #tpu.memory_space<vmem>>, vector<16x24xf32>
    %cst_10 = arith.constant dense<0.000000e+00> : vector<16x256xf32>
    %13 = tpu.matmul %12, %11, %cst_10 {dimension_numbers = #tpu.dot_dimension_numbers<[1], [0], [0], [1], [0, 0, 1, 1], [], []>} : vector<16x24xf32>, vector<24x256xf32>, vector<16x256xf32> -> vector<16x256xf32>
    %c0_11 = arith.constant 0 : index
    %c0_12 = arith.constant 0 : index
    %14 = vector.load %arg6[%c0_11, %c0_12] : memref<16x1xf32, #tpu.memory_space<vmem>>, vector<16x1xf32>
    %15 = vector.broadcast %14 : vector<16x1xf32> to vector<16x256xf32>
    %16 = arith.addf %13, %15 : vector<16x256xf32>
    %cst_13 = arith.constant 0.000000e+00 : f32
    %17 = vector.broadcast %cst_13 : f32 to vector<16x256xf32>
    %18 = arith.cmpf ogt, %16, %17 : vector<16x256xf32>
    %cst_14 = arith.constant 0.00999999977 : f32
    %19 = vector.broadcast %cst_14 : f32 to vector<16x256xf32>
    %20 = arith.mulf %19, %16 : vector<16x256xf32>
    %21 = arith.select %18, %16, %20 : vector<16x256xi1>, vector<16x256xf32>
    %c0_15 = arith.constant 0 : index
    %c0_16 = arith.constant 0 : index
    %22 = vector.load %arg7[%c0_15, %c0_16] : memref<12x16xf32, #tpu.memory_space<vmem>>, vector<12x16xf32>
    %cst_17 = arith.constant dense<0.000000e+00> : vector<12x256xf32>
    %23 = tpu.matmul %22, %21, %cst_17 {dimension_numbers = #tpu.dot_dimension_numbers<[1], [0], [0], [1], [0, 0, 1, 1], [], []>} : vector<12x16xf32>, vector<16x256xf32>, vector<12x256xf32> -> vector<12x256xf32>
    %c0_18 = arith.constant 0 : index
    %c0_19 = arith.constant 0 : index
    %24 = vector.load %arg8[%c0_18, %c0_19] : memref<12x1xf32, #tpu.memory_space<vmem>>, vector<12x1xf32>
    %25 = vector.broadcast %24 : vector<12x1xf32> to vector<12x256xf32>
    %26 = arith.addf %23, %25 : vector<12x256xf32>
    %c0_20 = arith.constant 0 : index
    %c0_21 = arith.constant 0 : index
    %c0_22 = arith.constant 0 : index
    %27 = vector.load %arg9[%c0_20, %c0_21, %c0_22] : memref<1x12x256xf32, #tpu.memory_space<vmem>>, vector<1x12x256xf32>
    %28 = vector.shape_cast %27 : vector<1x12x256xf32> to vector<12x256xf32>
    %29 = vector.shape_cast %26 : vector<12x256xf32> to vector<1x12x256xf32>
    tpu.vector_store %arg9[%c0_20, %c0_21, %c0_22], %29 {strides = array<i32>} : memref<1x12x256xf32, #tpu.memory_space<vmem>>, vector<1x12x256xf32>,
    return
  }
  func.func @transform_0(%arg0: i32, %arg1: i32) -> (i32, i32, i32) {
    %c0_i32 = arith.constant 0 : i32
    %c0_i32_0 = arith.constant 0 : i32
    return %arg0, %c0_i32, %arg1 : i32, i32, i32
  }
  func.func @transform_1(%arg0: i32, %arg1: i32) -> (i32, i32) {
    %c0_i32 = arith.constant 0 : i32
    %c0_i32_0 = arith.constant 0 : i32
    %c0_i32_1 = arith.constant 0 : i32
    return %c0_i32, %c0_i32_0 : i32, i32
  }
  func.func @transform_2(%arg0: i32, %arg1: i32) -> (i32, i32) {
    %c0_i32 = arith.constant 0 : i32
    %c0_i32_0 = arith.constant 0 : i32
    %c0_i32_1 = arith.constant 0 : i32
    return %c0_i32, %c0_i32_0 : i32, i32
  }
  func.func @transform_3(%arg0: i32, %arg1: i32) -> (i32, i32) {
    %c0_i32 = arith.constant 0 : i32
    %c0_i32_0 = arith.constant 0 : i32
    %c0_i32_1 = arith.constant 0 : i32
    return %c0_i32, %c0_i32_0 : i32, i32
  }
  func.func @transform_4(%arg0: i32, %arg1: i32) -> (i32, i32) {
    %c0_i32 = arith.constant 0 : i32
    %c0_i32_0 = arith.constant 0 : i32
    %c0_i32_1 = arith.constant 0 : i32
    return %c0_i32, %c0_i32_0 : i32, i32
  }
  func.func @transform_5(%arg0: i32, %arg1: i32) -> (i32, i32) {
    %c0_i32 = arith.constant 0 : i32
    %c0_i32_0 = arith.constant 0 : i32
    %c0_i32_1 = arith.constant 0 : i32
    return %c0_i32, %c0_i32_0 : i32, i32
  }
  func.func @transform_6(%arg0: i32, %arg1: i32) -> (i32, i32) {
    %c0_i32 = arith.constant 0 : i32
    %c0_i32_0 = arith.constant 0 : i32
    %c0_i32_1 = arith.constant 0 : i32
    return %c0_i32, %c0_i32_0 : i32, i32
  }
  func.func @transform_7(%arg0: i32, %arg1: i32) -> (i32, i32, i32) {
    %c0_i32 = arith.constant 0 : i32
    %c0_i32_0 = arith.constant 0 : i32
    return %arg0, %c0_i32, %arg1 : i32, i32, i32
  }
}

</mosaic_0001>

<llo_original>
// kernel: tpu_custom_call.1
$region0: #{tpu_custom_call.1}
  #allocation0 [shape = 'u32[]', space=smem, size = 0x4, offset = 0x4, fixed_abs, tag = 'smem constant byte address 0x4 - core index']
  #allocation1 [shape = 'u32[144,128]{1,0:T(1,128)}', space=vmem, size = 0x12000, scoped, tag = 'internal scratch']
  %s0 = inlined_call_operand.hbm [shape: f32[2,24,256], index: 0, kind: input, shape index: {}]
  %s1 = inlined_call_operand.vmem [shape: f32[24,24], index: 1, kind: input, shape index: {}]
  %s2 = inlined_call_operand.vmem [shape: f32[24,1], index: 2, kind: input, shape index: {}]
  %s3 = inlined_call_operand.vmem [shape: f32[16,24], index: 3, kind: input, shape index: {}]
  %s4 = inlined_call_operand.vmem [shape: f32[16,1], index: 4, kind: input, shape index: {}]
  %s5 = inlined_call_operand.vmem [shape: f32[12,16], index: 5, kind: input, shape index: {}]
  %s6 = inlined_call_operand.vmem [shape: f32[12,1], index: 6, kind: input, shape index: {}]
  %s7 = inlined_call_operand.vmem [shape: f32[2,12,256], index: 7, kind: output, shape index: {}]
  %s8 = sld [smem:[#allocation0]]
  $region65: #{tpu_custom_call.1} parent=0
    _
  %s10 = ssub.s32 1, %s8
  %s11 = scalar_select 0, %s10, %s8
  $region1: #{tpu_custom_call.1} parent=0
    #allocation2 [shape = 'u8[49152]{0}', space=vmem, size = 0xc000, scoped, tag = 'input window, operand 0']
    #allocation3 [shape = 's32[2]{0}', space=sflag, size = 0x8, scoped, tag = 'scoped memory for tpu_custom_call.1']
    %12 = vsyncpa [#allocation3], 0
    %s13 = scalar_lea.sflag [#allocation3], 1
    %14 = vsyncpa %s13, 0
    loop: start=0, step=1, limit=4
    $region2: #{tpu_custom_call.1} parent=1 // loop_pre_header
      _
    $region3: #{tpu_custom_call.1} parent=1 // loop_header
      %s16 = sphi 0, %s20
      %p17 = scmp.ge.s32.totalorder %s16, 4
      %s23 = sphi 0, %s35
      %s24 = sphi 0, %s31
      %s25 = sphi 0, %s23
      %s26 = sphi 0, %s24
      %s27 = sphi 0, %s25
      %s28 = sphi 0, %s26
      %s40 = sphi 0, %s42
      %s43 = sphi 0, %s40
      %s44 = sphi 0, %s43
      %s60 = sphi 0, %s44
      %s64 = sphi 0, %s64
      %s66 = sphi 0, %s64
      %s67 = sphi 0, %s66
      %s81 = sphi 0, %s67
      %s85 = sphi 0, %s85
      %s87 = sphi 0, %s85
      %s88 = sphi 0, %s87
      %s102 = sphi 0, %s88
      %s106 = sphi 0, %s106
      %s108 = sphi 0, %s106
      %s109 = sphi 0, %s108
      %s123 = sphi 0, %s109
      %s127 = sphi 0, %s127
      %s129 = sphi 0, %s127
      %s130 = sphi 0, %s129
      %s144 = sphi 0, %s130
      %s148 = sphi 0, %s148
      %s150 = sphi 0, %s148
      %s151 = sphi 0, %s150
      %s165 = sphi 0, %s151
      %s169 = sphi 0, %s169
      %s171 = sphi 0, %s169
      %s172 = sphi 0, %s171
      %s186 = sphi 0, %s172
      %s194 = sphi 0, %s196
      %s197 = sphi 0, %s194
      %s198 = sphi 0, %s197
      %s214 = sphi 0, %s198
    $region4: #{tpu_custom_call.1} parent=1 // loop_header_branch
      %19 = sbr.rel (%p17) target = $region8
    $region5: #{tpu_custom_call.1} parent=1 // loop_body
      %s21 = ssub.s32 %s16, 1
      %s22 = ssub.s32 %s16, 2
      %s29 = sadd.s32 1, %s24
      %p30 = scmp.ge.s32.totalorder %s29, 1
      %s31 = scalar_select %p30, 0, %s29
      %s32 = sadd.s32 1, %s23
      %s33 = scalar_select %p30, %s32, %s23
      %p34 = scmp.ge.s32.totalorder %s33, 2
      %s35 = scalar_select %p34, 0, %s33
      %s36 = ssub.s32 %s23, %s35
      %s37 = ssub.s32 %s24, %s31
      %s38 = sor.u32 %s36, %s37
      %p39 = scmp.eq.s32.totalorder %s38, 0
      %s41 = sadd.s32 %s40, 1
      %s42 = scalar_select %p39, %s40, %s41
      %p45 = pneg %p39
      %p46 = scmp.eq.s32.totalorder %s16, 1
      %p47 = por %p45, %p46
      %p48 = scmp.ne.s32.totalorder %s40, %s43
      %p49 = scmp.eq.s32.totalorder %s16, 0
      %p50 = por %p48, %p49
      %p51 = scmp.ne.s32.totalorder %s40, %s43
      %p52 = scmp.eq.s32.totalorder %s21, 1
      %p53 = por %p51, %p52
      %p54 = scmp.ne.s32.totalorder %s43, %s44
      %p55 = scmp.eq.s32.totalorder %s21, 0
      %p56 = por %p54, %p55
      %p57 = scmp.ne.s32.totalorder %s43, %s44
      %p58 = scmp.eq.s32.totalorder %s22, 1
      %p59 = por %p57, %p58
      %p61 = scmp.ne.s32.totalorder %s44, %s60
      %p62 = scmp.eq.s32.totalorder %s22, 0
      %p63 = por %p61, %p62
      %s65 = sadd.s32 %s64, 1
      %p68 = scmp.eq.s32.totalorder %s16, 1
      %p69 = scmp.ne.s32.totalorder %s64, %s66
      %p70 = scmp.eq.s32.totalorder %s16, 0
      %p71 = por %p69, %p70
      %p72 = scmp.ne.s32.totalorder %s64, %s66
      %p73 = scmp.eq.s32.totalorder %s21, 1
      %p74 = por %p72, %p73
      %p75 = scmp.ne.s32.totalorder %s66, %s67
      %p76 = scmp.eq.s32.totalorder %s21, 0
      %p77 = por %p75, %p76
      %p78 = scmp.ne.s32.totalorder %s66, %s67
      %p79 = scmp.eq.s32.totalorder %s22, 1
      %p80 = por %p78, %p79
      %p82 = scmp.ne.s32.totalorder %s67, %s81
      %p83 = scmp.eq.s32.totalorder %s22, 0
      %p84 = por %p82, %p83
      %s86 = sadd.s32 %s85, 1
      %p89 = scmp.eq.s32.totalorder %s16, 1
      %p90 = scmp.ne.s32.totalorder %s85, %s87
      %p91 = scmp.eq.s32.totalorder %s16, 0
      %p92 = por %p90, %p91
      %p93 = scmp.ne.s32.totalorder %s85, %s87
      %p94 = scmp.eq.s32.totalorder %s21, 1
      %p95 = por %p93, %p94
      %p96 = scmp.ne.s32.totalorder %s87, %s88
      %p97 = scmp.eq.s32.totalorder %s21, 0
      %p98 = por %p96, %p97
      %p99 = scmp.ne.s32.totalorder %s87, %s88
      %p100 = scmp.eq.s32.totalorder %s22, 1
      %p101 = por %p99, %p100
      %p103 = scmp.ne.s32.totalorder %s88, %s102
      %p104 = scmp.eq.s32.totalorder %s22, 0
      %p105 = por %p103, %p104
      %s107 = sadd.s32 %s106, 1
      %p110 = scmp.eq.s32.totalorder %s16, 1
      %p111 = scmp.ne.s32.totalorder %s106, %s108
      %p112 = scmp.eq.s32.totalorder %s16, 0
      %p113 = por %p111, %p112
      %p114 = scmp.ne.s32.totalorder %s106, %s108
      %p115 = scmp.eq.s32.totalorder %s21, 1
      %p116 = por %p114, %p115
      %p117 = scmp.ne.s32.totalorder %s108, %s109
      %p118 = scmp.eq.s32.totalorder %s21, 0
      %p119 = por %p117, %p118
      %p120 = scmp.ne.s32.totalorder %s108, %s109
      %p121 = scmp.eq.s32.totalorder %s22, 1
      %p122 = por %p120, %p121
      %p124 = scmp.ne.s32.totalorder %s109, %s123
      %p125 = scmp.eq.s32.totalorder %s22, 0
      %p126 = por %p124, %p125
      %s128 = sadd.s32 %s127, 1
      %p131 = scmp.eq.s32.totalorder %s16, 1
      %p132 = scmp.ne.s32.totalorder %s127, %s129
      %p133 = scmp.eq.s32.totalorder %s16, 0
      %p134 = por %p132, %p133
      %p135 = scmp.ne.s32.totalorder %s127, %s129
      %p136 = scmp.eq.s32.totalorder %s21, 1
      %p137 = por %p135, %p136
      %p138 = scmp.ne.s32.totalorder %s129, %s130
      %p139 = scmp.eq.s32.totalorder %s21, 0
      %p140 = por %p138, %p139
      %p141 = scmp.ne.s32.totalorder %s129, %s130
      %p142 = scmp.eq.s32.totalorder %s22, 1
      %p143 = por %p141, %p142
      %p145 = scmp.ne.s32.totalorder %s130, %s144
      %p146 = scmp.eq.s32.totalorder %s22, 0
      %p147 = por %p145, %p146
      %s149 = sadd.s32 %s148, 1
      %p152 = scmp.eq.s32.totalorder %s16, 1
      %p153 = scmp.ne.s32.totalorder %s148, %s150
      %p154 = scmp.eq.s32.totalorder %s16, 0
      %p155 = por %p153, %p154
      %p156 = scmp.ne.s32.totalorder %s148, %s150
      %p157 = scmp.eq.s32.totalorder %s21, 1
      %p158 = por %p156, %p157
      %p159 = scmp.ne.s32.totalorder %s150, %s151
      %p160 = scmp.eq.s32.totalorder %s21, 0
      %p161 = por %p159, %p160
      %p162 = scmp.ne.s32.totalorder %s150, %s151
      %p163 = scmp.eq.s32.totalorder %s22, 1
      %p164 = por %p162, %p163
      %p166 = scmp.ne.s32.totalorder %s151, %s165
      %p167 = scmp.eq.s32.totalorder %s22, 0
      %p168 = por %p166, %p167
      %s170 = sadd.s32 %s169, 1
      %p173 = scmp.eq.s32.totalorder %s16, 1
      %p174 = scmp.ne.s32.totalorder %s169, %s171
      %p175 = scmp.eq.s32.totalorder %s16, 0
      %p176 = por %p174, %p175
      %p177 = scmp.ne.s32.totalorder %s169, %s171
      %p178 = scmp.eq.s32.totalorder %s21, 1
      %p179 = por %p177, %p178
      %p180 = scmp.ne.s32.totalorder %s171, %s172
      %p181 = scmp.eq.s32.totalorder %s21, 0
      %p182 = por %p180, %p181
      %p183 = scmp.ne.s32.totalorder %s171, %s172
      %p184 = scmp.eq.s32.totalorder %s22, 1
      %p185 = por %p183, %p184
      %p187 = scmp.ne.s32.totalorder %s172, %s186
      %p188 = scmp.eq.s32.totalorder %s22, 0
      %p189 = por %p187, %p188
      %s190 = ssub.s32 %s23, %s35
      %s191 = ssub.s32 %s24, %s31
      %s192 = sor.u32 %s190, %s191
      %p193 = scmp.eq.s32.totalorder %s192, 0
      %s195 = sadd.s32 %s194, 1
      %s196 = scalar_select %p193, %s194, %s195
      %p199 = pneg %p193
      %p200 = scmp.eq.s32.totalorder %s16, 1
      %p201 = por %p199, %p200
      %p202 = scmp.ne.s32.totalorder %s194, %s197
      %p203 = scmp.eq.s32.totalorder %s16, 0
      %p204 = por %p202, %p203
      %p205 = scmp.ne.s32.totalorder %s194, %s197
      %p206 = scmp.eq.s32.totalorder %s21, 1
      %p207 = por %p205, %p206
      %p208 = scmp.ne.s32.totalorder %s197, %s198
      %p209 = scmp.eq.s32.totalorder %s21, 0
      %p210 = por %p208, %p209
      %p211 = scmp.ne.s32.totalorder %s197, %s198
      %p212 = scmp.eq.s32.totalorder %s22, 1
      %p213 = por %p211, %p212
      %p215 = scmp.ne.s32.totalorder %s198, %s214
      %p216 = scmp.eq.s32.totalorder %s22, 0
      %p217 = por %p215, %p216
      %p218 = scmp.le.s32.totalorder 1, %s16
      %p219 = scmp.lt.s32.totalorder %s16, 3
      %p220 = pnand %p218, %p219
      %p221 = pneg %p220
      // Predicated region
      $region9: #{tpu_custom_call.1} parent=5 // pred_check
        _
      $region10: #{tpu_custom_call.1} parent=5 // pred_check_branch
        %223 = sbr.rel (%p220) target = $region12
      $region11: #{tpu_custom_call.1} parent=5 // pred_region
        %s224 = ssub.s32 %s16, 1
        // Predicated region
        $region13: #{tpu_custom_call.1} parent=11 // pred_check
          %p225 = pneg %p77
        $region14: #{tpu_custom_call.1} parent=11 // pred_check_branch
          %227 = sbr.rel (%p225) target = $region16
        $region15: #{tpu_custom_call.1} parent=11 // pred_region
          _
        $region16: #{tpu_custom_call.1} parent=11 // pred_fallthru
          _
        // Predicated region
        $region17: #{tpu_custom_call.1} parent=11 // pred_check
          %p228 = pneg %p98
        $region18: #{tpu_custom_call.1} parent=11 // pred_check_branch
          %230 = sbr.rel (%p228) target = $region20
        $region19: #{tpu_custom_call.1} parent=11 // pred_region
          _
        $region20: #{tpu_custom_call.1} parent=11 // pred_fallthru
          _
        // Predicated region
        $region21: #{tpu_custom_call.1} parent=11 // pred_check
          %p231 = pneg %p119
        $region22: #{tpu_custom_call.1} parent=11 // pred_check_branch
          %233 = sbr.rel (%p231) target = $region24
        $region23: #{tpu_custom_call.1} parent=11 // pred_region
          _
        $region24: #{tpu_custom_call.1} parent=11 // pred_fallthru
          _
        // Predicated region
        $region25: #{tpu_custom_call.1} parent=11 // pred_check
          %p234 = pneg %p140
        $region26: #{tpu_custom_call.1} parent=11 // pred_check_branch
          %236 = sbr.rel (%p234) target = $region28
        $region27: #{tpu_custom_call.1} parent=11 // pred_region
          _
        $region28: #{tpu_custom_call.1} parent=11 // pred_fallthru
          _
        // Predicated region
        $region29: #{tpu_custom_call.1} parent=11 // pred_check
          %p237 = pneg %p161
        $region30: #{tpu_custom_call.1} parent=11 // pred_check_branch
          %239 = sbr.rel (%p237) target = $region32
        $region31: #{tpu_custom_call.1} parent=11 // pred_region
          _
        $region32: #{tpu_custom_call.1} parent=11 // pred_fallthru
          _
        // Predicated region
        $region33: #{tpu_custom_call.1} parent=11 // pred_check
          %p240 = pneg %p182
        $region34: #{tpu_custom_call.1} parent=11 // pred_check_branch
          %242 = sbr.rel (%p240) target = $region36
        $region35: #{tpu_custom_call.1} parent=11 // pred_region
          _
        $region36: #{tpu_custom_call.1} parent=11 // pred_fallthru
          _
      $region12: #{tpu_custom_call.1} parent=5 // pred_fallthru
        _
      %p243 = scmp.lt.s32.totalorder %s16, 2
      // Predicated region
      $region37: #{tpu_custom_call.1} parent=5 // pred_check
        %p244 = pneg %p243
      $region38: #{tpu_custom_call.1} parent=5 // pred_check_branch
        %246 = sbr.rel (%p244) target = $region40
      $region39: #{tpu_custom_call.1} parent=5 // pred_region
        // Predicated region
        $region41: #{tpu_custom_call.1} parent=39 // pred_check
          %p247 = pneg %p50
        $region42: #{tpu_custom_call.1} parent=39 // pred_check_branch
          %249 = sbr.rel (%p247) target = $region44
        $region43: #{tpu_custom_call.1} parent=39 // pred_region
          %s250 = sand.u32 %s40, 1
          %s251 = scalar_lea.sflag [#allocation3], %s250
          %s252 = sand.u32 %s40, 1
          %s253 = smul.addr %s252, 48
          %s254 = scalar_lea.vmem [#allocation2], %s253
          %s255 = smul.u32 2, %s24
          %s257 = ssub.s32 768, 768
          %258 = vsyncadd %s251, %s257
          %s259 = smul.addr %s23, 6
          %s260 = sadd.s32 %s255, %s259
          %s261 = smul.addr %s260, 128
          %s262 = scalar_lea.hbm %s0, %s261
          %s263 = sshll.u32 %s254, 4
          %s264 = int_to_ptr.vmem [resolvable:$true] %s263
          %269 = dma.hbm_to_vmem [thread:$0]  %s262, 768, %s264, %s251, 256, 256, 16
        $region44: #{tpu_custom_call.1} parent=39 // pred_fallthru
          _
      $region40: #{tpu_custom_call.1} parent=5 // pred_fallthru
        _
      %p270 = scmp.le.s32.totalorder 1, %s16
      %p271 = scmp.lt.s32.totalorder %s16, 3
      %p272 = pnand %p270, %p271
      %p273 = pneg %p272
      // Predicated region
      $region45: #{tpu_custom_call.1} parent=5 // pred_check
        _
      $region46: #{tpu_custom_call.1} parent=5 // pred_check_branch
        %275 = sbr.rel (%p272) target = $region48
      $region47: #{tpu_custom_call.1} parent=5 // pred_region
        %s276 = ssub.s32 %s16, 1
        %s277 = sand.u32 %s43, 1
        %s278 = scalar_lea.sflag [#allocation3], %s277
        %s279 = sand.u32 %s43, 1
        %s280 = smul.addr %s279, 48
        %s281 = scalar_lea.vmem [#allocation2], %s280
        // Predicated region
        $region49: #{tpu_custom_call.1} parent=47 // pred_check
          %p282 = pneg %p56
        $region50: #{tpu_custom_call.1} parent=47 // pred_check_branch
          %284 = sbr.rel (%p282) target = $region52
        $region51: #{tpu_custom_call.1} parent=47 // pred_region
          %285 = dma.done %s278, 768
        $region52: #{tpu_custom_call.1} parent=47 // pred_fallthru
          _
        %s286 = sand.u32 %s43, 1
        %s287 = scalar_lea.sflag [#allocation3], %s286
        %s288 = sand.u32 %s43, 1
        %s289 = smul.addr %s288, 48
        %s290 = scalar_lea.vmem [#allocation2], %s289
        %p291 = pneg %p56
        %p292 = pneg %p53
        %p293 = pneg %p77
        %p294 = pneg %p74
        %p295 = pneg %p98
        %p296 = pneg %p95
        %p297 = pneg %p119
        %p298 = pneg %p116
        %p299 = pneg %p140
        %p300 = pneg %p137
        %p301 = pneg %p161
        %p302 = pneg %p158
        %p303 = pneg %p182
        %p304 = pneg %p179
        %p305 = pneg %p210
        %p306 = pneg %p207
        %s307 = smul.u32 2, %s26
        %p308 = scmp.lt.s32.totalorder %s25, 1
        %s309 = scalar_select %p308, %s25, 1
        %p310 = scmp.lt.s32.totalorder %s307, 1
        %s311 = scalar_select %p310, %s307, 1
        %s312 = smul.addr %s309, 4
        %s313 = sadd.s32 %s311, %s312
        %s314 = smul.addr %s313, 8
        %s315 = scalar_lea.vmem %s7, %s314
        %s316 = smul.u32 2, %s26
        %s317 = smul.u32 2, %s26
        %p318 = scmp.lt.s32.totalorder %s25, 1
        %s319 = scalar_select %p318, %s25, 1
        %p320 = scmp.lt.s32.totalorder %s317, 1
        %s321 = scalar_select %p320, %s317, 1
        %s322 = smul.addr %s319, 4
        %s323 = sadd.s32 %s321, %s322
        %s324 = smul.addr %s323, 8
        %s325 = scalar_lea.vmem %s7, %s324
        %s326 = smul.u32 2, %s26
        %v327 = vld [vmem:[%s281] sm:$0xff]
        %v328 = vld [vmem:[%s281 + $0x8] sm:$0xff]
        %v329 = vld [vmem:[%s281 + $0x10] sm:$0xff]
        %v330 = vld [vmem:[%s281 + $0x18] sm:$0xff]
        %v331 = vld [vmem:[%s281 + $0x20] sm:$0xff]
        %v332 = vld [vmem:[%s281 + $0x28] sm:$0xff]
        %v333 = vld [vmem:[%s1] sm:$0xff]
        %v334 = vld [vmem:[%s1 + $0x8] sm:$0xff]
        %v335 = vld [vmem:[%s1 + $0x10] sm:$0xff]
        %v336 = vld [vmem:[%s2] sm:$0xff]
        %v337 = vld [vmem:[%s2 + $0x8] sm:$0xff]
        %v338 = vld [vmem:[%s2 + $0x10] sm:$0xff]
        %340 = vset.pattern.permute.xlu0 0
        %341 = vperm.xlu0 %340, %v336
        %v342 = vpop.permute.xlu0 %341
        %345 = vset.pattern.permute.xlu0 0
        %346 = vperm.xlu0 %345, %v337
        %v347 = vpop.permute.xlu0 %346
        %350 = vset.pattern.permute.xlu0 0
        %351 = vperm.xlu0 %350, %v338
        %v352 = vpop.permute.xlu0 %351
        %vm354 = vcmask 195584
        %v356 = vsel %vm354, %v333, 0
        %v359 = vsel %vm354, %v334, 0
        %v362 = vsel %vm354, %v335, 0
        %364 = vmatprep.subr.mxu0 %v328
        %365 = vmatpush1.msra.mxu0 %v327
        %366 = vmatprep.subr.mxu0 %v330
        %367 = vmatpush1.msra.mxu0 %v329
        %368 = vmatprep.subr.mxu0 %v332
        %369 = vmatpush1.msra.mxu0 %v331
        %370 = vmatprep.subr.mxu0 0.0
        %371 = vmatpush1.msra.mxu0 0.0
        %372 = vmatprep.subr.mxu0 0.0
        %373 = vmatpush1.msra.mxu0 0.0
        %374 = vmatprep.subr.mxu0 0.0
        %375 = vmatpush1.msra.mxu0 0.0
        %376 = vmatprep.subr.mxu0 0.0
        %377 = vmatpush1.msra.mxu0 0.0
        %378 = vmatprep.subr.mxu0 0.0
        %379 = vmatpush1.msra.mxu0 0.0
        %380 = vmatprep.subr.mxu0 0.0
        %381 = vmatpush1.msra.mxu0 0.0
        %382 = vmatprep.subr.mxu0 0.0
        %383 = vmatpush1.msra.mxu0 0.0
        %384 = vmatprep.subr.mxu0 0.0
        %385 = vmatpush1.msra.mxu0 0.0
        %386 = vmatprep.subr.mxu0 0.0
        %387 = vmatpush1.msra.mxu0 0.0
        %388 = vmatprep.subr.mxu0 0.0
        %389 = vmatpush1.msra.mxu0 0.0
        %390 = vmatprep.subr.mxu0 0.0
        %391 = vmatpush1.msra.mxu0 0.0
        %392 = vmatprep.subr.mxu0 0.0
        %393 = vmatpush1.msra.mxu0 0.0
        %394 = vmatprep.subr.mxu0 0.0
        %395 = vmatpush1.msra.mxu0 0.0
        %396 = vmatprep.subr.mxu0 0.0
        %397 = vmatpush1.msra.mxu0 0.0
        %398 = vmatprep.subr.mxu0 0.0
        %399 = vmatpush1.msra.mxu0 0.0
        %400 = vmatprep.subr.mxu0 0.0
        %401 = vmatpush1.msra.mxu0 0.0
        %402 = vmatprep.subr.mxu0 0.0
        %403 = vmatpush1.msra.mxu0 0.0
        %404 = vmatprep.subr.mxu0 0.0
        %405 = vmatpush1.msra.mxu0 0.0
        %406 = vmatprep.subr.mxu0 0.0
        %407 = vmatpush1.msra.mxu0 0.0
        %408 = vmatprep.subr.mxu0 0.0
        %409 = vmatpush1.msra.mxu0 0.0
        %410 = vmatprep.subr.mxu0 0.0
        %411 = vmatpush1.msra.mxu0 0.0
        %412 = vmatprep.subr.mxu0 0.0
        %413 = vmatpush1.msra.mxu0 0.0
        %414 = vmatprep.subr.mxu0 0.0
        %415 = vmatpush1.msra.mxu0 0.0
        %416 = vmatprep.subr.mxu0 0.0
        %417 = vmatpush1.msra.mxu0 0.0
        %418 = vmatprep.subr.mxu0 0.0
        %419 = vmatpush1.msra.mxu0 0.0
        %420 = vmatprep.subr.mxu0 0.0
        %421 = vmatpush1.msra.mxu0 0.0
        %422 = vmatprep.subr.mxu0 0.0
        %423 = vmatpush1.msra.mxu0 0.0
        %424 = vmatprep.subr.mxu0 0.0
        %425 = vmatpush1.msra.mxu0 0.0
        %426 = vmatprep.subr.mxu0 0.0
        %427 = vmatpush1.msra.mxu0 0.0
        %428 = vmatprep.mubr.f32.mxu0 0.0
        %429 = vmatmul.mubr.f32.gmra.mrb[0].mxu0 %v356
        %v430 = vpop.f32.mrb[0].mxu0
        %v431 = vadd.f32 %v342, %v430
        %v432 = vpop.f32.mrb[0].mxu0
        %v433 = vadd.f32 %v342, %v432
        %434 = vmatprep.mubr.f32.mxu0 0.0
        %435 = vmatmul.mubr.f32.gmra.mrb[0].mxu0 %v359
        %v436 = vpop.f32.mrb[0].mxu0
        %v437 = vadd.f32 %v347, %v436
        %v438 = vpop.f32.mrb[0].mxu0
        %v439 = vadd.f32 %v347, %v438
        %440 = vmatprep.mubr.f32.mxu0 0.0
        %441 = vmatmul.mubr.f32.gmra.mrb[0].mxu0 %v362
        %v442 = vpop.f32.mrb[0].mxu0
        %v443 = vadd.f32 %v352, %v442
        %v444 = vpop.f32.mrb[0].mxu0
        %v445 = vadd.f32 %v352, %v444
        %446 = vdwg.mxu0
        %vm447 = vcmp.gt.f32.partialorder %v431, 0.0
        %vm448 = vcmp.gt.f32.partialorder %v433, 0.0
        %vm449 = vcmp.gt.f32.partialorder %v437, 0.0
        %vm450 = vcmp.gt.f32.partialorder %v439, 0.0
        %vm451 = vcmp.gt.f32.partialorder %v443, 0.0
        %vm452 = vcmp.gt.f32.partialorder %v445, 0.0
        %v453 = vmul.f32 %v431, 0.01
        %v454 = vmul.f32 %v433, 0.01
        %v455 = vmul.f32 %v437, 0.01
        %v456 = vmul.f32 %v439, 0.01
        %v457 = vmul.f32 %v443, 0.01
        %v458 = vmul.f32 %v445, 0.01
        %v459 = vsel %vm447, %v431, %v453
        %v460 = vsel %vm448, %v433, %v454
        %v461 = vsel %vm449, %v437, %v455
        %v462 = vsel %vm450, %v439, %v456
        %v463 = vsel %vm451, %v443, %v457
        %v464 = vsel %vm452, %v445, %v458
        %v465 = vld [vmem:[%s3] sm:$0xff]
        %v466 = vld [vmem:[%s3 + $0x8] sm:$0xff]
        %v467 = vld [vmem:[%s4] sm:$0xff]
        %v468 = vld [vmem:[%s4 + $0x8] sm:$0xff]
        %470 = vset.pattern.permute.xlu0 0
        %471 = vperm.xlu0 %470, %v467
        %v472 = vpop.permute.xlu0 %471
        %475 = vset.pattern.permute.xlu0 0
        %476 = vperm.xlu0 %475, %v468
        %v477 = vpop.permute.xlu0 %476
        %v480 = vsel %vm354, %v465, 0
        %v483 = vsel %vm354, %v466, 0
        %485 = vmatprep.subr.mxu0 %v460
        %486 = vmatpush1.msra.mxu0 %v459
        %487 = vmatprep.subr.mxu0 %v462
        %488 = vmatpush1.msra.mxu0 %v461
        %489 = vmatprep.subr.mxu0 %v464
        %490 = vmatpush1.msra.mxu0 %v463
        %491 = vmatprep.subr.mxu0 0.0
        %492 = vmatpush1.msra.mxu0 0.0
        %493 = vmatprep.subr.mxu0 0.0
        %494 = vmatpush1.msra.mxu0 0.0
        %495 = vmatprep.subr.mxu0 0.0
        %496 = vmatpush1.msra.mxu0 0.0
        %497 = vmatprep.subr.mxu0 0.0
        %498 = vmatpush1.msra.mxu0 0.0
        %499 = vmatprep.subr.mxu0 0.0
        %500 = vmatpush1.msra.mxu0 0.0
        %501 = vmatprep.subr.mxu0 0.0
        %502 = vmatpush1.msra.mxu0 0.0
        %503 = vmatprep.subr.mxu0 0.0
        %504 = vmatpush1.msra.mxu0 0.0
        %505 = vmatprep.subr.mxu0 0.0
        %506 = vmatpush1.msra.mxu0 0.0
        %507 = vmatprep.subr.mxu0 0.0
        %508 = vmatpush1.msra.mxu0 0.0
        %509 = vmatprep.subr.mxu0 0.0
        %510 = vmatpush1.msra.mxu0 0.0
        %511 = vmatprep.subr.mxu0 0.0
        %512 = vmatpush1.msra.mxu0 0.0
        %513 = vmatprep.subr.mxu0 0.0
        %514 = vmatpush1.msra.mxu0 0.0
        %515 = vmatprep.subr.mxu0 0.0
        %516 = vmatpush1.msra.mxu0 0.0
        %517 = vmatprep.subr.mxu0 0.0
        %518 = vmatpush1.msra.mxu0 0.0
        %519 = vmatprep.subr.mxu0 0.0
        %520 = vmatpush1.msra.mxu0 0.0
        %521 = vmatprep.subr.mxu0 0.0
        %522 = vmatpush1.msra.mxu0 0.0
        %523 = vmatprep.subr.mxu0 0.0
        %524 = vmatpush1.msra.mxu0 0.0
        %525 = vmatprep.subr.mxu0 0.0
        %526 = vmatpush1.msra.mxu0 0.0
        %527 = vmatprep.subr.mxu0 0.0
        %528 = vmatpush1.msra.mxu0 0.0
        %529 = vmatprep.subr.mxu0 0.0
        %530 = vmatpush1.msra.mxu0 0.0
        %531 = vmatprep.subr.mxu0 0.0
        %532 = vmatpush1.msra.mxu0 0.0
        %533 = vmatprep.subr.mxu0 0.0
        %534 = vmatpush1.msra.mxu0 0.0
        %535 = vmatprep.subr.mxu0 0.0
        %536 = vmatpush1.msra.mxu0 0.0
        %537 = vmatprep.subr.mxu0 0.0
        %538 = vmatpush1.msra.mxu0 0.0
        %539 = vmatprep.subr.mxu0 0.0
        %540 = vmatpush1.msra.mxu0 0.0
        %541 = vmatprep.subr.mxu0 0.0
        %542 = vmatpush1.msra.mxu0 0.0
        %543 = vmatprep.subr.mxu0 0.0
        %544 = vmatpush1.msra.mxu0 0.0
        %545 = vmatprep.subr.mxu0 0.0
        %546 = vmatpush1.msra.mxu0 0.0
        %547 = vmatprep.subr.mxu0 0.0
        %548 = vmatpush1.msra.mxu0 0.0
        %549 = vmatprep.mubr.f32.mxu0 0.0
        %550 = vmatmul.mubr.f32.gmra.mrb[0].mxu0 %v480
        %v551 = vpop.f32.mrb[0].mxu0
        %v552 = vadd.f32 %v472, %v551
        %v553 = vpop.f32.mrb[0].mxu0
        %v554 = vadd.f32 %v472, %v553
        %555 = vmatprep.mubr.f32.mxu0 0.0
        %556 = vmatmul.mubr.f32.gmra.mrb[0].mxu0 %v483
        %v557 = vpop.f32.mrb[0].mxu0
        %v558 = vadd.f32 %v477, %v557
        %v559 = vpop.f32.mrb[0].mxu0
        %v560 = vadd.f32 %v477, %v559
        %561 = vdwg.mxu0
        %vm562 = vcmp.gt.f32.partialorder %v552, 0.0
        %vm563 = vcmp.gt.f32.partialorder %v554, 0.0
        %vm564 = vcmp.gt.f32.partialorder %v558, 0.0
        %vm565 = vcmp.gt.f32.partialorder %v560, 0.0
        %v566 = vmul.f32 %v552, 0.01
        %v567 = vmul.f32 %v554, 0.01
        %v568 = vmul.f32 %v558, 0.01
        %v569 = vmul.f32 %v560, 0.01
        %v570 = vsel %vm562, %v552, %v566
        %v571 = vsel %vm563, %v554, %v567
        %v572 = vsel %vm564, %v558, %v568
        %v573 = vsel %vm565, %v560, %v569
        %v574 = vld [vmem:[%s5] sm:$0xff]
        %v575 = vld [vmem:[%s5 + $0x8] sm:$0xf]
        %v576 = vld [vmem:[%s6] sm:$0xff]
        %v577 = vld [vmem:[%s6 + $0x8] sm:$0xf]
        %579 = vset.pattern.permute.xlu0 0
        %580 = vperm.xlu0 %579, %v576
        %v581 = vpop.permute.xlu0 %580
        %584 = vset.pattern.permute.xlu0 0
        %585 = vperm.xlu0 %584, %v577
        %v586 = vpop.permute.xlu0 %585
        %vm588 = vcmask 130048
        %v590 = vsel %vm588, %v574, 0
        %v593 = vsel %vm588, %v575, 0
        %595 = vmatprep.subr.mxu0 %v571
        %596 = vmatpush1.msra.mxu0 %v570
        %597 = vmatprep.subr.mxu0 %v573
        %598 = vmatpush1.msra.mxu0 %v572
        %599 = vmatprep.subr.mxu0 0.0
        %600 = vmatpush1.msra.mxu0 0.0
        %601 = vmatprep.subr.mxu0 0.0
        %602 = vmatpush1.msra.mxu0 0.0
        %603 = vmatprep.subr.mxu0 0.0
        %604 = vmatpush1.msra.mxu0 0.0
        %605 = vmatprep.subr.mxu0 0.0
        %606 = vmatpush1.msra.mxu0 0.0
        %607 = vmatprep.subr.mxu0 0.0
        %608 = vmatpush1.msra.mxu0 0.0
        %609 = vmatprep.subr.mxu0 0.0
        %610 = vmatpush1.msra.mxu0 0.0
        %611 = vmatprep.subr.mxu0 0.0
        %612 = vmatpush1.msra.mxu0 0.0
        %613 = vmatprep.subr.mxu0 0.0
        %614 = vmatpush1.msra.mxu0 0.0
        %615 = vmatprep.subr.mxu0 0.0
        %616 = vmatpush1.msra.mxu0 0.0
        %617 = vmatprep.subr.mxu0 0.0
        %618 = vmatpush1.msra.mxu0 0.0
        %619 = vmatprep.subr.mxu0 0.0
        %620 = vmatpush1.msra.mxu0 0.0
        %621 = vmatprep.subr.mxu0 0.0
        %622 = vmatpush1.msra.mxu0 0.0
        %623 = vmatprep.subr.mxu0 0.0
        %624 = vmatpush1.msra.mxu0 0.0
        %625 = vmatprep.subr.mxu0 0.0
        %626 = vmatpush1.msra.mxu0 0.0
        %627 = vmatprep.subr.mxu0 0.0
        %628 = vmatpush1.msra.mxu0 0.0
        %629 = vmatprep.subr.mxu0 0.0
        %630 = vmatpush1.msra.mxu0 0.0
        %631 = vmatprep.subr.mxu0 0.0
        %632 = vmatpush1.msra.mxu0 0.0
        %633 = vmatprep.subr.mxu0 0.0
        %634 = vmatpush1.msra.mxu0 0.0
        %635 = vmatprep.subr.mxu0 0.0
        %636 = vmatpush1.msra.mxu0 0.0
        %637 = vmatprep.subr.mxu0 0.0
        %638 = vmatpush1.msra.mxu0 0.0
        %639 = vmatprep.subr.mxu0 0.0
        %640 = vmatpush1.msra.mxu0 0.0
        %641 = vmatprep.subr.mxu0 0.0
        %642 = vmatpush1.msra.mxu0 0.0
        %643 = vmatprep.subr.mxu0 0.0
        %644 = vmatpush1.msra.mxu0 0.0
        %645 = vmatprep.subr.mxu0 0.0
        %646 = vmatpush1.msra.mxu0 0.0
        %647 = vmatprep.subr.mxu0 0.0
        %648 = vmatpush1.msra.mxu0 0.0
        %649 = vmatprep.subr.mxu0 0.0
        %650 = vmatpush1.msra.mxu0 0.0
        %651 = vmatprep.subr.mxu0 0.0
        %652 = vmatpush1.msra.mxu0 0.0
        %653 = vmatprep.subr.mxu0 0.0
        %654 = vmatpush1.msra.mxu0 0.0
        %655 = vmatprep.subr.mxu0 0.0
        %656 = vmatpush1.msra.mxu0 0.0
        %657 = vmatprep.subr.mxu0 0.0
        %658 = vmatpush1.msra.mxu0 0.0
        %659 = vmatprep.mubr.f32.mxu0 0.0
        %660 = vmatmul.mubr.f32.gmra.mrb[0].mxu0 %v590
        %v661 = vpop.f32.mrb[0].mxu0
        %v662 = vadd.f32 %v581, %v661
        %v663 = vpop.f32.mrb[0].mxu0
        %v664 = vadd.f32 %v581, %v663
        %665 = vmatprep.mubr.f32.mxu0 0.0
        %666 = vmatmul.mubr.f32.gmra.mrb[0].mxu0 %v593
        %v667 = vpop.f32.mrb[0].mxu0
        %v668 = vadd.f32 %v586, %v667
        %v669 = vpop.f32.mrb[0].mxu0
        %v670 = vadd.f32 %v586, %v669
        %671 = vdwg.mxu0
        %672 = vst [vmem:[%s325] sm:$0xff] %v662
        %673 = vst [vmem:[%s325 + $0x8] sm:$0xff] %v664
        %674 = vst [vmem:[%s325 + $0x10] sm:$0xf] %v668
        %675 = vst [vmem:[%s325 + $0x18] sm:$0xf] %v670
        %s676 = smul.u32 2, %s26
        %p677 = scmp.lt.s32.totalorder %s25, 1
        %s678 = scalar_select %p677, %s25, 1
        %p679 = scmp.lt.s32.totalorder %s676, 1
        %s680 = scalar_select %p679, %s676, 1
        %s681 = smul.addr %s678, 4
        %s682 = sadd.s32 %s680, %s681
        %s683 = smul.addr %s682, 8
        %s684 = scalar_lea.vmem %s7, %s683
        // Predicated region
        $region53: #{tpu_custom_call.1} parent=47 // pred_check
          %p685 = pneg %p207
        $region54: #{tpu_custom_call.1} parent=47 // pred_check_branch
          %687 = sbr.rel (%p685) target = $region56
        $region55: #{tpu_custom_call.1} parent=47 // pred_region
          %s688 = smul.u32 2, %s26
        $region56: #{tpu_custom_call.1} parent=47 // pred_fallthru
          _
      $region48: #{tpu_custom_call.1} parent=5 // pred_fallthru
        _
      %p689 = scmp.le.s32.totalorder 2, %s16
      // Predicated region
      $region57: #{tpu_custom_call.1} parent=5 // pred_check
        %p690 = pneg %p689
      $region58: #{tpu_custom_call.1} parent=5 // pred_check_branch
        %692 = sbr.rel (%p690) target = $region60
      $region59: #{tpu_custom_call.1} parent=5 // pred_region
        %s693 = ssub.s32 %s16, 2
        // Predicated region
        $region61: #{tpu_custom_call.1} parent=59 // pred_check
          %p694 = pneg %p213
        $region62: #{tpu_custom_call.1} parent=59 // pred_check_branch
          %696 = sbr.rel (%p694) target = $region64
        $region63: #{tpu_custom_call.1} parent=59 // pred_region
          %s697 = smul.u32 2, %s28
          %p698 = scmp.lt.s32.totalorder %s27, 1
          %s699 = scalar_select %p698, %s27, 1
          %p700 = scmp.lt.s32.totalorder %s697, 1
          %s701 = scalar_select %p700, %s697, 1
          %s702 = smul.addr %s699, 4
          %s703 = sadd.s32 %s701, %s702
          %s704 = smul.addr %s703, 8
          %s705 = scalar_lea.vmem %s7, %s704
        $region64: #{tpu_custom_call.1} parent=59 // pred_fallthru
          _
      $region60: #{tpu_custom_call.1} parent=5 // pred_fallthru
        _
    $region6: #{tpu_custom_call.1} parent=1 // loop_footer
      %s20 = sadd.s32 1, %s16
    $region7: #{tpu_custom_call.1} parent=1 // loop_footer_branch
      %15 = sbr.rel target = $region3
    $region8: #{tpu_custom_call.1} parent=1 // loop_exit
      _
    %706 = vsyncpa [#allocation3], 1
    %s707 = scalar_lea.sflag [#allocation3], 1
    %708 = vsyncpa %s707, 1

</llo_original>
